<compile_context>
chip_gen: v7x
topology: tpu7x:2x2x1
jax: 0.10.0
libtpu: 0.0.40
codegen_flags: <defaults>
</compile_context>

<pallas_src>
import functools

import jax
import jax.numpy as jnp
from jax.experimental import pallas as pl
from jax.experimental.pallas import tpu as pltpu

_LANES = 128
_VMEM_LIMIT = 32 * 1024 * 1024       # scoped VMEM limit; safe on v5e/v6e/v7x
_MAX_BLOCK_BYTES = 6 * 1024 * 1024   # per-buffer cap -> 4 buffers <= 24 MiB < limit


def _relu_offset_kernel(off_ref, x_ref, o_ref):
    # off_ref: SMEM float32 scalar (1,);  x_ref / o_ref: VMEM (tile, cols) blocks.
    off = off_ref[0].astype(o_ref.dtype)        # read + cast once per block
    o_ref[...] = jnp.maximum(x_ref[...], off)   # 1 vld + 1 vmax + 1 vst per vreg


def _round_up(v: int, m: int) -> int:
    return ((v + m - 1) // m) * m


def _num_tensorcores() -> int:
    """Best-effort TensorCore count behind one Pallas device (trace-time query).

    Errs toward 1 (never hurts correctness; only skips the even-split heuristic).
    """
    try:
        kind = str(getattr(jax.devices()[0], "device_kind", "")).lower()
        if "lite" in kind or "v5e" in kind or "v6e" in kind or "v2" in kind or "v3" in kind:
            return 1                      # single-TC parts
        for tag in ("v4", "v5p", "v7", "7x"):
            if tag in kind:
                return 2                  # megacore (v4/v5p) / dual-TC v7x
        return 1
    except Exception:
        return 1


def _pick_tile(rows: int, cols: int, itemsize: int, sub: int,
               block_bytes: int, total_bytes: int, n_tc: int) -> int:
    """Rows per block: big lane-dense tiles; even >=2-step grids on multi-TC parts."""
    budget = min(block_bytes, _MAX_BLOCK_BYTES)
    cap = max(sub, (budget // max(1, cols * itemsize)) // sub * sub)
    force_split = (n_tc >= 2) and (total_bytes >= (1 << 20)) and (rows >= 2 * sub)

    if rows <= cap and not force_split:
        return rows                       # single block == full row extent (always legal)

    tile = min(cap, _round_up(rows, sub))
    steps = pl.cdiv(rows, tile)
    if force_split and (steps < 2 or steps % 2 == 1):
        steps = max(2, steps + (steps % 2))            # even, >= 2 for balanced cores
        tile = min(cap, _round_up(pl.cdiv(rows, steps), sub))
    return tile


def _stream_2d(x2d: jax.Array, off_f32: jax.Array, tile: int, donate: bool) -> jax.Array:
    rows, cols = x2d.shape
    itemsize = x2d.dtype.itemsize
    grid = (pl.cdiv(rows, tile),)
    extra = {"input_output_aliases": {1: 0}} if donate else {}
    return pl.pallas_call(
        _relu_offset_kernel,
        out_shape=jax.ShapeDtypeStruct((rows, cols), x2d.dtype),
        grid_spec=pltpu.PrefetchScalarGridSpec(
            num_scalar_prefetch=0,
            grid=grid,
            in_specs=[
                pl.BlockSpec(memory_space=pltpu.SMEM),          # offset scalar
                pl.BlockSpec((tile, cols), lambda i: (i, 0)),   # x row-tile
            ],
            out_specs=pl.BlockSpec((tile, cols), lambda i: (i, 0)),
        ),
        compiler_params=pltpu.CompilerParams(
            dimension_semantics=("parallel",),
            vmem_limit_bytes=_VMEM_LIMIT,
        ),
        cost_estimate=pl.CostEstimate(
            flops=rows * cols,
            transcendentals=0,
            bytes_accessed=2 * rows * cols * itemsize + 4,
        ),
        **extra,
    )(off_f32, x2d)


@functools.partial(jax.jit, static_argnames=("block_bytes", "donate"))
def relu_with_offset(x: jax.Array, offset: jax.Array,
                     block_bytes: int = 4 * 1024 * 1024,
                     donate: bool = False) -> jax.Array:
    """y = max(x, offset), elementwise. `offset` is the module's shape-(1,) parameter."""
    orig_shape = x.shape
    dtype = x.dtype
    itemsize = dtype.itemsize
    total = x.size
    if total == 0:
        return x

    off = offset.astype(jnp.float32).reshape((1,))   # keep the SMEM scalar 32-bit
    sub = max(8, 32 // itemsize)                     # dtype-aware sublane multiple
    n_tc = _num_tensorcores()
    total_bytes = total * itemsize

    if total % _LANES == 0:
        # Fast path: lane-dense (rows, 128) view — free reshape, no padding ever.
        rows = total // _LANES
        x2d = x.reshape(rows, _LANES)
        tile = _pick_tile(rows, _LANES, itemsize, sub, block_bytes, total_bytes, n_tc)
        return _stream_2d(x2d, off, tile, donate).reshape(orig_shape)

    # Ragged element count: copy-free 2-D view (leading dims collapsed, native last
    # dim). Block last dim == full array dim, so the (8,128) rule is satisfied for
    # any last-dim size, and Pallas masks the partial trailing row block. Lane-sparse
    # when the last dim is small, but avoids the old pad + slice double HBM pass.
    if x.ndim >= 2:
        last = int(orig_shape[-1])
        lead = total // last
    else:
        lead, last = 1, total
    min_block_bytes = min(lead, sub) * last * itemsize
    if min_block_bytes > _MAX_BLOCK_BYTES:
        # Pathological ragged shape (huge non-128-multiple last dim): XLA's own
        # elementwise max is already 1 read + 1 write at the HBM roofline.
        return jnp.maximum(x, off[0].astype(dtype))
    x2d = x.reshape(lead, last)
    tile = _pick_tile(lead, last, itemsize, sub, block_bytes, total_bytes, n_tc)
    return _stream_2d(x2d, off, tile, donate).reshape(orig_shape)


if __name__ == "__main__":
    key = jax.random.PRNGKey(0)
    offset_param = jnp.array([1.0], dtype=jnp.float32)   # like nn.Parameter([offset])

    # Main case: small NCHW input -> aligned fast path, single block.
    x = jax.random.normal(key, (2, 4, 16, 16), dtype=jnp.float32)
    y = jax.block_until_ready(relu_with_offset(x, offset_param))
    assert y.shape == x.shape and y.dtype == x.dtype
    assert jnp.allclose(y, jnp.maximum(x, offset_param[0])), "mismatch (main case)"

    k1, k2, k3, k4 = jax.random.split(key, 4)

    # Aligned multi-block grid (small per-buffer budget forces >1 grid step).
    x_big = jax.random.normal(k1, (8, 16, 16, 16), dtype=jnp.float32)
    y_big = jax.block_until_ready(relu_with_offset(x_big, offset_param, block_bytes=64 * 1024))
    assert jnp.allclose(y_big, jnp.maximum(x_big, offset_param[0])), "mismatch (aligned multi-block)"

    # Ragged element count: copy-free (lead, last) view, no pad / no slice.
    x_rag = jax.random.normal(k2, (3, 5, 7, 11), dtype=jnp.float32)
    y_rag = jax.block_until_ready(relu_with_offset(x_rag, offset_param))
    assert jnp.allclose(y_rag, jnp.maximum(x_rag, offset_param[0])), "mismatch (ragged case)"

    # bf16: dtype-aware (16,128) sublane tiling, multi-block grid.
    x_bf = jax.random.normal(k3, (2, 8, 16, 32), dtype=jnp.bfloat16)
    y_bf = jax.block_until_ready(relu_with_offset(x_bf, offset_param, block_bytes=8 * 1024))
    assert jnp.array_equal(y_bf, jnp.maximum(x_bf, offset_param[0].astype(jnp.bfloat16))), "mismatch (bf16)"

    # Row count not a multiple of the tile: masked ragged trailing row block.
    x_odd = jax.random.normal(k4, (130, 128), dtype=jnp.float32)
    y_odd = jax.block_until_ready(relu_with_offset(x_odd, offset_param, block_bytes=32 * 1024))
    assert jnp.allclose(y_odd, jnp.maximum(x_odd, offset_param[0])), "mismatch (masked row block)"

    # Optional input/output aliasing of the input HBM buffer.
    y_alias = jax.block_until_ready(relu_with_offset(x, offset_param, donate=True))
    assert jnp.allclose(y_alias, jnp.maximum(x, offset_param[0])), "mismatch (aliased case)"

    print("KERNEL_OK")
</pallas_src>

<mosaic_0001>
module attributes {stable_mosaic.version = 11 : i64} {
  func.func @_relu_offset_kernel(%arg0: i32, %arg1: memref<1xf32, #tpu.memory_space<smem>>, %arg2: memref<16x128xf32, #tpu.memory_space<vmem>>, %arg3: memref<16x128xf32, #tpu.memory_space<vmem>>) attributes {dimension_semantics = [#tpu.dimension_semantics<parallel>], iteration_bounds = array<i64: 1>, scalar_prefetch = 0 : i64, scratch_operands = 0 : i64, tpu.core_type = #tpu.core_type<tc>, window_params = [{transform_indices = @transform_0, window_bounds = array<i64: 1>}, {transform_indices = @transform_1, window_bounds = array<i64: 16, 128>}, {transform_indices = @transform_2, window_bounds = array<i64: 16, 128>}]} {
    %c0 = arith.constant 0 : index
    %0 = memref.load %arg1[%c0] : memref<1xf32, #tpu.memory_space<smem>>
    %c0_0 = arith.constant 0 : index
    %c0_1 = arith.constant 0 : index
    %1 = vector.load %arg2[%c0_0, %c0_1] : memref<16x128xf32, #tpu.memory_space<vmem>>, vector<16x128xf32>
    %2 = vector.broadcast %0 : f32 to vector<16x128xf32>
    %3 = arith.maximumf %1, %2 : vector<16x128xf32>
    %c0_2 = arith.constant 0 : index
    %c0_3 = arith.constant 0 : index
    %4 = vector.load %arg3[%c0_2, %c0_3] : memref<16x128xf32, #tpu.memory_space<vmem>>, vector<16x128xf32>
    tpu.vector_store %arg3[%c0_2, %c0_3], %3 {strides = array<i32>} : memref<16x128xf32, #tpu.memory_space<vmem>>, vector<16x128xf32>,
    return
  }
  func.func @transform_0(%arg0: i32) -> i32 {
    %c0_i32 = arith.constant 0 : i32
    %c0_i32_0 = arith.constant 0 : i32
    return %c0_i32 : i32
  }
  func.func @transform_1(%arg0: i32) -> (i32, i32) {
    %c0_i32 = arith.constant 0 : i32
    %c0_i32_0 = arith.constant 0 : i32
    return %arg0, %c0_i32 : i32, i32
  }
  func.func @transform_2(%arg0: i32) -> (i32, i32) {
    %c0_i32 = arith.constant 0 : i32
    %c0_i32_0 = arith.constant 0 : i32
    return %arg0, %c0_i32 : i32, i32
  }
}

</mosaic_0001>

<llo_original>
// kernel: relu_with_offset.1
$region0: #{relu_with_offset.1}
  #allocation0 [shape = 'u32[]', space=smem, size = 0x4, offset = 0x4, fixed_abs, tag = 'smem constant byte address 0x4 - core index']
  #allocation1 [shape = 'u32[144,128]{1,0:T(1,128)}', space=vmem, size = 0x12000, scoped, tag = 'internal scratch']
  #allocation2 [shape = 'f32[1]{0:T(128)S(6)}', space=smem, size = 0x200, scoped, tag = 'scoped memory for relu_with_offset.1']
  %s0 = inlined_call_operand.<no memory space> [shape: f32[1], index: 0, kind: input, shape index: {}]
  %s1 = inlined_call_operand.vmem [shape: f32[16,128], index: 1, kind: input, shape index: {}]
  %s2 = inlined_call_operand.vmem [shape: f32[16,128], index: 2, kind: output, shape index: {}]
  %s3 = sld [smem:[#allocation0]]
  $region18: #{relu_with_offset.1} parent=0
    _
  %s5 = ssub.s32 1, %s3
  %s6 = scalar_select 0, %s5, %s3
  %7 = sst [smem:[#allocation2]] %s0
  // Predicated region
  $region2: #{relu_with_offset.1} parent=0 // pred_check
    _
  $region3: #{relu_with_offset.1} parent=0 // pred_check_branch
    %9 = sbr.rel (0) target = $region5
  $region4: #{relu_with_offset.1} parent=0 // pred_region
    _
  $region5: #{relu_with_offset.1} parent=0 // pred_fallthru
    _
  // Predicated region
  $region6: #{relu_with_offset.1} parent=0 // pred_check
    _
  $region7: #{relu_with_offset.1} parent=0 // pred_check_branch
    %11 = sbr.rel (0) target = $region9
  $region8: #{relu_with_offset.1} parent=0 // pred_region
    _
  $region9: #{relu_with_offset.1} parent=0 // pred_fallthru
    _
  %s12 = sld [smem:[#allocation2]]
  %v13 = vld [vmem:[%s1] sm:$0xff]
  %v14 = vld [vmem:[%s1 + $0x8] sm:$0xff]
  %v15 = vstv %s12
  %v16 = vmax.f32 %v13, %v15
  %v17 = vmax.f32 %v14, %v15
  %18 = vst [vmem:[%s2] sm:$0xff] %v16
  %19 = vst [vmem:[%s2 + $0x8] sm:$0xff] %v17
  // Predicated region
  $region10: #{relu_with_offset.1} parent=0 // pred_check
    _
  $region11: #{relu_with_offset.1} parent=0 // pred_check_branch
    %21 = sbr.rel (0) target = $region13
  $region12: #{relu_with_offset.1} parent=0 // pred_region
    _
  $region13: #{relu_with_offset.1} parent=0 // pred_fallthru
    _
  // Predicated region
  $region14: #{relu_with_offset.1} parent=0 // pred_check
    _
  $region15: #{relu_with_offset.1} parent=0 // pred_check_branch
    %23 = sbr.rel (0) target = $region17
  $region16: #{relu_with_offset.1} parent=0 // pred_region
    _
  $region17: #{relu_with_offset.1} parent=0 // pred_fallthru
    _

</llo_original>
